<compile_context>
chip_gen: v5e
topology: v5e:2x2
jax: 0.10.0
libtpu: 0.0.40
codegen_flags: <defaults>
</compile_context>

<pallas_src>
import jax
import jax.numpy as jnp
from jax.experimental import pallas as pl
from jax.experimental.pallas import tpu as pltpu


def _round_up(x, m):
    return ((x + m - 1) // m) * m


def zpredictor_kernel(x_ref, w1_ref, b1_ref, w2_ref, b2_ref, out_ref):
    # x_ref : (2, TB)   feature-major batch tile (batch on lanes)
    # w1_ref: (64, 2)   == fc1.weight  (out_features, in_features)
    # b1_ref: (64, 1)   == fc1.bias[:, None]
    # w2_ref: (1, 64)   == fc2.weight
    # b2_ref: (1, 1)    == fc2.bias[:, None]
    # out   : (1, TB)   lane-dense output tile
    x = x_ref[...]

    # fc1 + ReLU: (64, 2) @ (2, TB) -> (64, TB)
    h = jnp.dot(w1_ref[...], x, preferred_element_type=jnp.float32)
    h = jnp.maximum(h + b1_ref[...], 0.0)

    # fc2: (1, 64) @ (64, TB) -> (1, TB)
    y = jnp.dot(w2_ref[...], h, preferred_element_type=jnp.float32) + b2_ref[...]
    out_ref[...] = y.astype(out_ref.dtype)


def zpredictor_forward(x_n, x_delta, w1, b1, w2, b2, *, block_b=8192):
    """x_n, x_delta: (B, 1) float32; weights in PyTorch nn.Linear layout.

    w1: (64, 2), b1: (64,), w2: (1, 64), b2: (1,). Returns (B, 1) float32.
    """
    B = x_n.shape[0]
    assert x_delta.shape[0] == B

    # Pack wrapper-side into a lane-dense, feature-major slab (2, B):
    # row 0 = x_n, row 1 = x_delta  (matches torch.cat([x_n, x_delta], -1)).
    x = jnp.concatenate(
        [x_n.reshape(1, B), x_delta.reshape(1, B)], axis=0
    ).astype(jnp.float32)

    tb = min(block_b, _round_up(B, 128))   # batch tile (lanes per grid step)
    bp = _round_up(B, tb)                  # padded batch
    if bp != B:
        x = jnp.pad(x, ((0, 0), (0, bp - B)))

    w1 = jnp.asarray(w1, jnp.float32).reshape(64, 2)
    b1 = jnp.asarray(b1, jnp.float32).reshape(64, 1)
    w2 = jnp.asarray(w2, jnp.float32).reshape(1, 64)
    b2 = jnp.asarray(b2, jnp.float32).reshape(1, 1)

    grid = (bp // tb,)

    cost = pl.CostEstimate(
        flops=int(bp) * (2 * 2 * 64 + 2 * 64 + 2 * 64),      # fc1 + fc2 + bias/relu
        transcendentals=0,
        bytes_accessed=int(bp) * 12 + (64 * 2 + 64 + 64 + 1) * 4,
    )

    out = pl.pallas_call(
        zpredictor_kernel,
        out_shape=jax.ShapeDtypeStruct((1, bp), jnp.float32),
        grid=grid,
        in_specs=[
            pl.BlockSpec((2, tb), lambda i: (0, i)),    # streamed batch slab
            pl.BlockSpec((64, 2), lambda i: (0, 0)),    # weights: constant block,
            pl.BlockSpec((64, 1), lambda i: (0, 0)),    #   DMA'd once for the grid
            pl.BlockSpec((1, 64), lambda i: (0, 0)),
            pl.BlockSpec((1, 1), lambda i: (0, 0)),
        ],
        out_specs=pl.BlockSpec((1, tb), lambda i: (0, i)),
        compiler_params=pltpu.CompilerParams(
            dimension_semantics=("parallel",),          # megacore / 2-TC sharding
        ),
        cost_estimate=cost,
    )(x, w1, b1, w2, b2)

    return out[:, :B].reshape(B, 1)


def init_params(key):
    """Deterministic init mimicking nn.Linear default (uniform +- 1/sqrt(fan_in)).

    Weights are kept in PyTorch layout: fc1.weight (64,2), fc2.weight (1,64).
    """
    k1, k2, k3, k4 = jax.random.split(key, 4)
    bound1 = 1.0 / jnp.sqrt(2.0)    # fc1 fan_in = 2
    bound2 = 1.0 / jnp.sqrt(64.0)   # fc2 fan_in = 64
    w1 = jax.random.uniform(k1, (64, 2), jnp.float32, -bound1, bound1)
    b1 = jax.random.uniform(k2, (64,), jnp.float32, -bound1, bound1)
    w2 = jax.random.uniform(k3, (1, 64), jnp.float32, -bound2, bound2)
    b2 = jax.random.uniform(k4, (1,), jnp.float32, -bound2, bound2)
    return w1, b1, w2, b2


def reference_forward(x_n, x_delta, w1, b1, w2, b2):
    x = jnp.concatenate([x_n, x_delta], axis=-1)        # (B, 2)
    h = jnp.maximum(x @ w1.T + b1, 0.0)                 # (B, 64)
    return h @ w2.T + b2                                # (B, 1)


if __name__ == "__main__":
    key = jax.random.PRNGKey(0)
    kx, kd, kp = jax.random.split(key, 3)
    params = init_params(kp)

    # Small demo batch (single grid step).
    B = 8
    x_n = jax.random.normal(kx, (B, 1), jnp.float32)
    x_delta = jax.random.normal(kd, (B, 1), jnp.float32)

    out = jax.block_until_ready(zpredictor_forward(x_n, x_delta, *params))
    ref = reference_forward(x_n, x_delta, *params)
    assert out.shape == (B, 1)
    assert jnp.allclose(out, ref, atol=1e-5, rtol=1e-5), "mismatch vs reference (B=8)"

    # Exercise the multi-step batch grid + tail padding path.
    B2 = 300
    x_n2 = jax.random.normal(kx, (B2, 1), jnp.float32)
    x_delta2 = jax.random.normal(kd, (B2, 1), jnp.float32)

    out2 = jax.block_until_ready(
        zpredictor_forward(x_n2, x_delta2, *params, block_b=128))
    ref2 = reference_forward(x_n2, x_delta2, *params)
    assert out2.shape == (B2, 1)
    assert jnp.allclose(out2, ref2, atol=1e-5, rtol=1e-5), "mismatch vs reference (B=300)"

    print("KERNEL_OK")
</pallas_src>

<mosaic_0001>
module attributes {stable_mosaic.version = 11 : i64} {
  func.func @zpredictor_kernel(%arg0: i32, %arg1: memref<2x128xf32, #tpu.memory_space<vmem>>, %arg2: memref<64x2xf32, #tpu.memory_space<vmem>>, %arg3: memref<64x1xf32, #tpu.memory_space<vmem>>, %arg4: memref<1x64xf32, #tpu.memory_space<vmem>>, %arg5: memref<1x1xf32, #tpu.memory_space<vmem>>, %arg6: memref<1x128xf32, #tpu.memory_space<vmem>>) attributes {dimension_semantics = [#tpu.dimension_semantics<parallel>], iteration_bounds = array<i64: 1>, scalar_prefetch = 0 : i64, scratch_operands = 0 : i64, tpu.core_type = #tpu.core_type<tc>, window_params = [{transform_indices = @transform_0, window_bounds = array<i64: 2, 128>}, {pipeline_mode = #tpu.pipeline_mode<synchronous>, transform_indices = @transform_1, window_bounds = array<i64: 64, 2>}, {pipeline_mode = #tpu.pipeline_mode<synchronous>, transform_indices = @transform_2, window_bounds = array<i64: 64, 1>}, {pipeline_mode = #tpu.pipeline_mode<synchronous>, transform_indices = @transform_3, window_bounds = array<i64: 1, 64>}, {pipeline_mode = #tpu.pipeline_mode<synchronous>, transform_indices = @transform_4, window_bounds = array<i64: 1, 1>}, {transform_indices = @transform_5, window_bounds = array<i64: 1, 128>}]} {
    %c0 = arith.constant 0 : index
    %c0_0 = arith.constant 0 : index
    %0 = vector.load %arg1[%c0, %c0_0] : memref<2x128xf32, #tpu.memory_space<vmem>>, vector<2x128xf32>
    %c0_1 = arith.constant 0 : index
    %c0_2 = arith.constant 0 : index
    %1 = vector.load %arg2[%c0_1, %c0_2] : memref<64x2xf32, #tpu.memory_space<vmem>>, vector<64x2xf32>
    %cst = arith.constant dense<0.000000e+00> : vector<64x128xf32>
    %2 = tpu.matmul %1, %0, %cst {dimension_numbers = #tpu.dot_dimension_numbers<[1], [0], [0], [1], [0, 0, 1, 1], [], []>} : vector<64x2xf32>, vector<2x128xf32>, vector<64x128xf32> -> vector<64x128xf32>
    %c0_3 = arith.constant 0 : index
    %c0_4 = arith.constant 0 : index
    %3 = vector.load %arg3[%c0_3, %c0_4] : memref<64x1xf32, #tpu.memory_space<vmem>>, vector<64x1xf32>
    %4 = vector.broadcast %3 : vector<64x1xf32> to vector<64x128xf32>
    %5 = arith.addf %2, %4 : vector<64x128xf32>
    %cst_5 = arith.constant 0.000000e+00 : f32
    %6 = vector.broadcast %cst_5 : f32 to vector<64x128xf32>
    %7 = arith.maximumf %5, %6 : vector<64x128xf32>
    %c0_6 = arith.constant 0 : index
    %c0_7 = arith.constant 0 : index
    %8 = vector.load %arg4[%c0_6, %c0_7] : memref<1x64xf32, #tpu.memory_space<vmem>>, vector<1x64xf32>
    %cst_8 = arith.constant dense<0.000000e+00> : vector<1x128xf32>
    %9 = tpu.matmul %8, %7, %cst_8 {dimension_numbers = #tpu.dot_dimension_numbers<[1], [0], [0], [1], [0, 0, 1, 1], [], []>} : vector<1x64xf32>, vector<64x128xf32>, vector<1x128xf32> -> vector<1x128xf32>
    %c0_9 = arith.constant 0 : index
    %c0_10 = arith.constant 0 : index
    %10 = vector.load %arg5[%c0_9, %c0_10] : memref<1x1xf32, #tpu.memory_space<vmem>>, vector<1x1xf32>
    %11 = vector.broadcast %10 : vector<1x1xf32> to vector<1x128xf32>
    %12 = arith.addf %9, %11 : vector<1x128xf32>
    %c0_11 = arith.constant 0 : index
    %c0_12 = arith.constant 0 : index
    %13 = vector.load %arg6[%c0_11, %c0_12] : memref<1x128xf32, #tpu.memory_space<vmem>>, vector<1x128xf32>
    tpu.vector_store %arg6[%c0_11, %c0_12], %12 {strides = array<i32>} : memref<1x128xf32, #tpu.memory_space<vmem>>, vector<1x128xf32>,
    return
  }
  func.func @transform_0(%arg0: i32) -> (i32, i32) {
    %c0_i32 = arith.constant 0 : i32
    %c0_i32_0 = arith.constant 0 : i32
    return %c0_i32, %arg0 : i32, i32
  }
  func.func @transform_1(%arg0: i32) -> (i32, i32) {
    %c0_i32 = arith.constant 0 : i32
    %c0_i32_0 = arith.constant 0 : i32
    %c0_i32_1 = arith.constant 0 : i32
    return %c0_i32, %c0_i32_0 : i32, i32
  }
  func.func @transform_2(%arg0: i32) -> (i32, i32) {
    %c0_i32 = arith.constant 0 : i32
    %c0_i32_0 = arith.constant 0 : i32
    %c0_i32_1 = arith.constant 0 : i32
    return %c0_i32, %c0_i32_0 : i32, i32
  }
  func.func @transform_3(%arg0: i32) -> (i32, i32) {
    %c0_i32 = arith.constant 0 : i32
    %c0_i32_0 = arith.constant 0 : i32
    %c0_i32_1 = arith.constant 0 : i32
    return %c0_i32, %c0_i32_0 : i32, i32
  }
  func.func @transform_4(%arg0: i32) -> (i32, i32) {
    %c0_i32 = arith.constant 0 : i32
    %c0_i32_0 = arith.constant 0 : i32
    %c0_i32_1 = arith.constant 0 : i32
    return %c0_i32, %c0_i32_0 : i32, i32
  }
  func.func @transform_5(%arg0: i32) -> (i32, i32) {
    %c0_i32 = arith.constant 0 : i32
    %c0_i32_0 = arith.constant 0 : i32
    return %c0_i32, %arg0 : i32, i32
  }
}

</mosaic_0001>

<llo_original>
// kernel: tpu_custom_call.1
$region0: #{tpu_custom_call.1}
  #allocation0 [shape = 'u32[]', space=smem, size = 0x4, offset = 0x4, fixed_abs, tag = 'smem constant byte address 0x4 - core index']
  #allocation1 [shape = 'u32[72,128]{1,0:T(1,128)}', space=vmem, size = 0x9000, scoped, tag = 'internal scratch']
  #allocation2 [shape = 'f32[1,1]{1,0:T(1,128)S(1)}', space=vmem, size = 0x200, scoped, tag = 'scoped memory for tpu_custom_call.1']
  %s0 = inlined_call_operand.vmem [shape: f32[2,128], index: 0, kind: input, shape index: {}]
  %s1 = inlined_call_operand.vmem [shape: f32[64,2], index: 1, kind: input, shape index: {}]
  %s2 = inlined_call_operand.vmem [shape: f32[64,1], index: 2, kind: input, shape index: {}]
  %s3 = inlined_call_operand.vmem [shape: f32[1,64], index: 3, kind: input, shape index: {}]
  %s4 = inlined_call_operand.<no memory space> [shape: f32[1,1], index: 4, kind: input, shape index: {}]
  %s5 = inlined_call_operand.hbm [shape: f32[1,128], index: 5, kind: output, shape index: {}]
  %s6 = sld [smem:[#allocation0]]
  $region30: #{tpu_custom_call.1} parent=0
    _
  %s8 = ssub.s32 1, %s6
  %s9 = scalar_select 0, %s8, %s6
  %v10 = vstv %s4
  %11 = vst [vmem:[#allocation2] sm:$0x1] %v10
  $region1: #{tpu_custom_call.1} parent=0
    #allocation3 [shape = 'u8[512]{0}', space=vmem, size = 0x400, scoped, tag = 'output window, operand 0, single buffered']
    #allocation4 [shape = 's32[1]{0}', space=sflag, size = 0x4, scoped, tag = 'scoped memory for tpu_custom_call.1']
    %12 = vsyncpa [#allocation4], 0
    // Predicated region
    $region2: #{tpu_custom_call.1} parent=1 // pred_check
      _
    $region3: #{tpu_custom_call.1} parent=1 // pred_check_branch
      %14 = sbr.rel (0) target = $region5
    $region4: #{tpu_custom_call.1} parent=1 // pred_region
      _
    $region5: #{tpu_custom_call.1} parent=1 // pred_fallthru
      _
    // Predicated region
    $region6: #{tpu_custom_call.1} parent=1 // pred_check
      _
    $region7: #{tpu_custom_call.1} parent=1 // pred_check_branch
      %16 = sbr.rel (0) target = $region9
    $region8: #{tpu_custom_call.1} parent=1 // pred_region
      _
    $region9: #{tpu_custom_call.1} parent=1 // pred_fallthru
      _
    // Predicated region
    $region10: #{tpu_custom_call.1} parent=1 // pred_check
      _
    $region11: #{tpu_custom_call.1} parent=1 // pred_check_branch
      %18 = sbr.rel (0) target = $region13
    $region12: #{tpu_custom_call.1} parent=1 // pred_region
      _
    $region13: #{tpu_custom_call.1} parent=1 // pred_fallthru
      _
    // Predicated region
    $region14: #{tpu_custom_call.1} parent=1 // pred_check
      _
    $region15: #{tpu_custom_call.1} parent=1 // pred_check_branch
      %20 = sbr.rel (0) target = $region17
    $region16: #{tpu_custom_call.1} parent=1 // pred_region
      _
    $region17: #{tpu_custom_call.1} parent=1 // pred_fallthru
      _
    // Predicated region
    $region18: #{tpu_custom_call.1} parent=1 // pred_check
      _
    $region19: #{tpu_custom_call.1} parent=1 // pred_check_branch
      %22 = sbr.rel (0) target = $region21
    $region20: #{tpu_custom_call.1} parent=1 // pred_region
      _
    $region21: #{tpu_custom_call.1} parent=1 // pred_fallthru
      _
    %v23 = vld [vmem:[%s0] sm:$0x3]
    %v24 = vld [vmem:[%s1] sm:$0xff]
    %v25 = vld [vmem:[%s1 + $0x8] sm:$0xff]
    %v26 = vld [vmem:[%s1 + $0x10] sm:$0xff]
    %v27 = vld [vmem:[%s1 + $0x18] sm:$0xff]
    %v28 = vld [vmem:[%s1 + $0x20] sm:$0xff]
    %v29 = vld [vmem:[%s1 + $0x28] sm:$0xff]
    %v30 = vld [vmem:[%s1 + $0x30] sm:$0xff]
    %v31 = vld [vmem:[%s1 + $0x38] sm:$0xff]
    %v32 = vld [vmem:[%s2] sm:$0xff]
    %v33 = vld [vmem:[%s2 + $0x8] sm:$0xff]
    %v34 = vld [vmem:[%s2 + $0x10] sm:$0xff]
    %v35 = vld [vmem:[%s2 + $0x18] sm:$0xff]
    %v36 = vld [vmem:[%s2 + $0x20] sm:$0xff]
    %v37 = vld [vmem:[%s2 + $0x28] sm:$0xff]
    %v38 = vld [vmem:[%s2 + $0x30] sm:$0xff]
    %v39 = vld [vmem:[%s2 + $0x38] sm:$0xff]
    %41 = vset.pattern.permute.xlu0 0
    %42 = vperm.xlu0 %41, %v32
    %v43 = vpop.permute.xlu0 %42
    %46 = vset.pattern.permute.xlu0 0
    %47 = vperm.xlu0 %46, %v33
    %v48 = vpop.permute.xlu0 %47
    %51 = vset.pattern.permute.xlu0 0
    %52 = vperm.xlu0 %51, %v34
    %v53 = vpop.permute.xlu0 %52
    %56 = vset.pattern.permute.xlu0 0
    %57 = vperm.xlu0 %56, %v35
    %v58 = vpop.permute.xlu0 %57
    %61 = vset.pattern.permute.xlu0 0
    %62 = vperm.xlu0 %61, %v36
    %v63 = vpop.permute.xlu0 %62
    %66 = vset.pattern.permute.xlu0 0
    %67 = vperm.xlu0 %66, %v37
    %v68 = vpop.permute.xlu0 %67
    %71 = vset.pattern.permute.xlu0 0
    %72 = vperm.xlu0 %71, %v38
    %v73 = vpop.permute.xlu0 %72
    %76 = vset.pattern.permute.xlu0 0
    %77 = vperm.xlu0 %76, %v39
    %v78 = vpop.permute.xlu0 %77
    %vm80 = vcmask 15360
    %v82 = vsel %vm80, %v24, 0
    %v85 = vsel %vm80, %v25, 0
    %v88 = vsel %vm80, %v26, 0
    %v91 = vsel %vm80, %v27, 0
    %v94 = vsel %vm80, %v28, 0
    %v97 = vsel %vm80, %v29, 0
    %v100 = vsel %vm80, %v30, 0
    %v103 = vsel %vm80, %v31, 0
    %vm105 = vcmask 1041408
    %v107 = vsel %vm105, %v23, 0
    %109 = vmatpush.msra.mxu0 0.0
    %110 = vmatpush.msra.mxu0 0.0
    %111 = vmatpush.msra.mxu0 0.0
    %112 = vmatpush.msra.mxu0 0.0
    %113 = vmatpush.msra.mxu0 0.0
    %114 = vmatpush.msra.mxu0 0.0
    %115 = vmatpush.msra.mxu0 0.0
    %116 = vmatpush.msra.mxu0 0.0
    %117 = vmatpush.msra.mxu0 0.0
    %118 = vmatpush.msra.mxu0 0.0
    %119 = vmatpush.msra.mxu0 0.0
    %120 = vmatpush.msra.mxu0 0.0
    %121 = vmatpush.msra.mxu0 0.0
    %122 = vmatpush.msra.mxu0 0.0
    %123 = vmatpush.msra.mxu0 0.0
    %124 = vmatpush.msra.mxu0 %v107
    %125 = vmatmul.f32.gmra.mxu0 %v82
    %v126 = vpop.f32.mrf.mxu0
    %v127 = vadd.f32 %v43, %v126
    %128 = vmatmul.f32.gmra.mxu0 %v85
    %v129 = vpop.f32.mrf.mxu0
    %v130 = vadd.f32 %v48, %v129
    %131 = vmatmul.f32.gmra.mxu0 %v88
    %v132 = vpop.f32.mrf.mxu0
    %v133 = vadd.f32 %v53, %v132
    %134 = vmatmul.f32.gmra.mxu0 %v91
    %v135 = vpop.f32.mrf.mxu0
    %v136 = vadd.f32 %v58, %v135
    %137 = vmatmul.f32.gmra.mxu0 %v94
    %v138 = vpop.f32.mrf.mxu0
    %v139 = vadd.f32 %v63, %v138
    %140 = vmatmul.f32.gmra.mxu0 %v97
    %v141 = vpop.f32.mrf.mxu0
    %v142 = vadd.f32 %v68, %v141
    %143 = vmatmul.f32.gmra.mxu0 %v100
    %v144 = vpop.f32.mrf.mxu0
    %v145 = vadd.f32 %v73, %v144
    %146 = vmatmul.f32.gmra.mxu0 %v103
    %v147 = vpop.f32.mrf.mxu0
    %v148 = vadd.f32 %v78, %v147
    %149 = vdwg.mxu0
    %v150 = vmax.f32 %v127, 0.0
    %v151 = vmax.f32 %v130, 0.0
    %v152 = vmax.f32 %v133, 0.0
    %v153 = vmax.f32 %v136, 0.0
    %v154 = vmax.f32 %v139, 0.0
    %v155 = vmax.f32 %v142, 0.0
    %v156 = vmax.f32 %v145, 0.0
    %v157 = vmax.f32 %v148, 0.0
    %v158 = vld [vmem:[%s3] sm:$0x1]
    %v159 = vld [vmem:[#allocation2] sm:$0x1]
    %161 = vset.pattern.permute.xlu0 0
    %162 = vperm.xlu0 %161, %v159
    %v163 = vpop.permute.xlu0 %162
    %v165 = vperm.slane %v163, 0
    %vm166 = vcmask 523264
    %v168 = vsel %vm166, %v158, 0
    %170 = vmatpush.msra.mxu0 0.0
    %171 = vmatpush.msra.mxu0 0.0
    %172 = vmatpush.msra.mxu0 0.0
    %173 = vmatpush.msra.mxu0 0.0
    %174 = vmatpush.msra.mxu0 0.0
    %175 = vmatpush.msra.mxu0 0.0
    %176 = vmatpush.msra.mxu0 0.0
    %177 = vmatpush.msra.mxu0 0.0
    %178 = vmatpush.msra.mxu0 %v157
    %179 = vmatpush.msra.mxu0 %v156
    %180 = vmatpush.msra.mxu0 %v155
    %181 = vmatpush.msra.mxu0 %v154
    %182 = vmatpush.msra.mxu0 %v153
    %183 = vmatpush.msra.mxu0 %v152
    %184 = vmatpush.msra.mxu0 %v151
    %185 = vmatpush.msra.mxu0 %v150
    %186 = vmatmul.f32.gmra.mxu0 %v168
    %v187 = vpop.f32.mrf.mxu0
    %v188 = vadd.f32 %v165, %v187
    %189 = vdwg.mxu0
    %190 = vst [vmem:[#allocation3] sm:$0x1] %v188
    // Predicated region
    $region22: #{tpu_custom_call.1} parent=1 // pred_check
      _
    $region23: #{tpu_custom_call.1} parent=1 // pred_check_branch
      %192 = sbr.rel (0) target = $region25
    $region24: #{tpu_custom_call.1} parent=1 // pred_region
      %194 = vsyncadd [#allocation4], 0
      %s196 = sshll.u32 [#allocation3], 4
      %s197 = int_to_ptr.vmem [resolvable:$true] %s196
      %s198 = sshll.u32 %s5, 4
      %s199 = int_to_ptr.hbm [resolvable:$true] %s198
      %201 = dma.vmem_to_hbm [thread:$0]  %s197, 16, %s199, [#allocation4]
    $region25: #{tpu_custom_call.1} parent=1 // pred_fallthru
      _
    // Predicated region
    $region26: #{tpu_custom_call.1} parent=1 // pred_check
      _
    $region27: #{tpu_custom_call.1} parent=1 // pred_check_branch
      %203 = sbr.rel (0) target = $region29
    $region28: #{tpu_custom_call.1} parent=1 // pred_region
      %205 = dma.done [#allocation4], 16
    $region29: #{tpu_custom_call.1} parent=1 // pred_fallthru
      _
    %206 = vsyncpa [#allocation4], 1

</llo_original>
